<compile_context>
chip_gen: v7x
topology: tpu7x:2x2x1
jax: 0.10.0
libtpu: 0.0.40
codegen_flags: <defaults>
</compile_context>

<pallas_src>
import functools

import jax
import jax.numpy as jnp
from jax.experimental import pallas as pl
from jax.experimental.pallas import tpu as pltpu


def custom_model_kernel(x_ref, w0t_ref, w1t_ref, o_ref):
    """Fused: out = ((x @ W0^T) @ W1^T) + x for one M-tile.

    w0t_ref: (D, Dp)  = W0^T, output dim zero-padded D -> Dp (lane-dense hidden)
    w1t_ref: (Dp, D)  = W1^T, contraction dim zero-padded D -> Dp
    """
    x = x_ref[...]                                                # (tm, D)
    h = jnp.dot(x, w0t_ref[...],
                preferred_element_type=jnp.float32)               # (tm, Dp)
    y = jnp.dot(h, w1t_ref[...],
                preferred_element_type=jnp.float32)               # (tm, D)
    o_ref[...] = (y + x.astype(jnp.float32)).astype(o_ref.dtype)


def prep_weights(w0, w1):
    """One-time parameter prep: transpose + pad the hidden dim to a lane
    multiple (100 -> 128). Call once at parameter-load time, NOT per forward."""
    d = w0.shape[0]
    assert w0.shape == (d, d) and w1.shape == (d, d)
    dp = ((d + 127) // 128) * 128
    w0t = jnp.zeros((d, dp), w0.dtype).at[:, :d].set(w0.T)        # (D, Dp)
    w1t = jnp.zeros((dp, d), w1.dtype).at[:d, :].set(w1.T)        # (Dp, D)
    return w0t, w1t


@jax.jit
def custom_model(x, w0t, w1t):
    """out = (x @ W0^T) @ W1^T + x, with weights already prepped by prep_weights."""
    m, d = x.shape
    dp = w0t.shape[1]
    assert w0t.shape == (d, dp) and w1t.shape == (dp, d)

    # M-tile: full batch for small M (grid of 1, no per-step overhead);
    # 512-row tiles with resident weights for large/batched M.
    tm = m if m <= 512 else 512
    grid = (pl.cdiv(m, tm),)

    return pl.pallas_call(
        custom_model_kernel,
        out_shape=jax.ShapeDtypeStruct((m, d), x.dtype),
        grid=grid,
        in_specs=[
            pl.BlockSpec((tm, d), lambda i: (i, 0)),      # x: tiled along M
            pl.BlockSpec((d, dp), lambda i: (0, 0)),      # W0^T: resident
            pl.BlockSpec((dp, d), lambda i: (0, 0)),      # W1^T: resident
        ],
        out_specs=pl.BlockSpec((tm, d), lambda i: (i, 0)),
        input_output_aliases={0: 0},                      # write result into x's buffer
        compiler_params=pltpu.CompilerParams(
            dimension_semantics=("parallel",),            # v7x: shard M across 2 TCs
        ),
    )(x, w0t, w1t)


if __name__ == "__main__":
    # Shapes match the reference script: x = torch.rand((8, 100)), size = 100.
    B, SIZE = 8, 100

    key = jax.random.PRNGKey(0)
    kx, k0, k1 = jax.random.split(key, 3)
    # torch.rand -> uniform [0, 1); mirror that deterministically here.
    x = jax.random.uniform(kx, (B, SIZE), dtype=jnp.float32)
    w0 = jax.random.uniform(k0, (SIZE, SIZE), dtype=jnp.float32)  # l0.weight
    w1 = jax.random.uniform(k1, (SIZE, SIZE), dtype=jnp.float32)  # l1.weight

    # Pure-JAX reference of the forward semantics (computed up front).
    ref = (x @ w0.T) @ w1.T + x

    # One-time weight prep (parameter-load time), then the jitted forward.
    w0t, w1t = prep_weights(w0, w1)
    w0t, w1t = jax.block_until_ready((w0t, w1t))

    out = custom_model(x, w0t, w1t)
    out = jax.block_until_ready(out)

    assert out.shape == (B, SIZE)
    assert jnp.allclose(out, ref, rtol=1e-4, atol=1e-4), "mismatch vs reference"

    print("KERNEL_OK")
</pallas_src>

<mosaic_0001>
module attributes {stable_mosaic.version = 11 : i64} {
  func.func @custom_model_kernel(%arg0: i32, %arg1: memref<8x100xf32, #tpu.memory_space<vmem>>, %arg2: memref<100x128xf32, #tpu.memory_space<vmem>>, %arg3: memref<128x100xf32, #tpu.memory_space<vmem>>, %arg4: memref<8x100xf32, #tpu.memory_space<vmem>>) attributes {dimension_semantics = [#tpu.dimension_semantics<parallel>], iteration_bounds = array<i64: 1>, scalar_prefetch = 0 : i64, scratch_operands = 0 : i64, tpu.core_type = #tpu.core_type<tc>, window_params = [{transform_indices = @transform_0, window_bounds = array<i64: 8, 100>}, {pipeline_mode = #tpu.pipeline_mode<synchronous>, transform_indices = @transform_1, window_bounds = array<i64: 100, 128>}, {pipeline_mode = #tpu.pipeline_mode<synchronous>, transform_indices = @transform_2, window_bounds = array<i64: 128, 100>}, {transform_indices = @transform_3, window_bounds = array<i64: 8, 100>}]} {
    %c0 = arith.constant 0 : index
    %c0_0 = arith.constant 0 : index
    %0 = vector.load %arg1[%c0, %c0_0] : memref<8x100xf32, #tpu.memory_space<vmem>>, vector<8x100xf32>
    %c0_1 = arith.constant 0 : index
    %c0_2 = arith.constant 0 : index
    %1 = vector.load %arg2[%c0_1, %c0_2] : memref<100x128xf32, #tpu.memory_space<vmem>>, vector<100x128xf32>
    %cst = arith.constant dense<0.000000e+00> : vector<8x128xf32>
    %2 = tpu.matmul %0, %1, %cst {dimension_numbers = #tpu.dot_dimension_numbers<[1], [0], [0], [1], [0, 0, 1, 1], [], []>} : vector<8x100xf32>, vector<100x128xf32>, vector<8x128xf32> -> vector<8x128xf32>
    %c0_3 = arith.constant 0 : index
    %c0_4 = arith.constant 0 : index
    %3 = vector.load %arg3[%c0_3, %c0_4] : memref<128x100xf32, #tpu.memory_space<vmem>>, vector<128x100xf32>
    %cst_5 = arith.constant dense<0.000000e+00> : vector<8x100xf32>
    %4 = tpu.matmul %2, %3, %cst_5 {dimension_numbers = #tpu.dot_dimension_numbers<[1], [0], [0], [1], [0, 0, 1, 1], [], []>} : vector<8x128xf32>, vector<128x100xf32>, vector<8x100xf32> -> vector<8x100xf32>
    %5 = arith.addf %4, %0 : vector<8x100xf32>
    %c0_6 = arith.constant 0 : index
    %c0_7 = arith.constant 0 : index
    %6 = vector.load %arg4[%c0_6, %c0_7] : memref<8x100xf32, #tpu.memory_space<vmem>>, vector<8x100xf32>
    tpu.vector_store %arg4[%c0_6, %c0_7], %5 {strides = array<i32>} : memref<8x100xf32, #tpu.memory_space<vmem>>, vector<8x100xf32>,
    return
  }
  func.func @transform_0(%arg0: i32) -> (i32, i32) {
    %c0_i32 = arith.constant 0 : i32
    %c0_i32_0 = arith.constant 0 : i32
    return %arg0, %c0_i32 : i32, i32
  }
  func.func @transform_1(%arg0: i32) -> (i32, i32) {
    %c0_i32 = arith.constant 0 : i32
    %c0_i32_0 = arith.constant 0 : i32
    %c0_i32_1 = arith.constant 0 : i32
    return %c0_i32, %c0_i32_0 : i32, i32
  }
  func.func @transform_2(%arg0: i32) -> (i32, i32) {
    %c0_i32 = arith.constant 0 : i32
    %c0_i32_0 = arith.constant 0 : i32
    %c0_i32_1 = arith.constant 0 : i32
    return %c0_i32, %c0_i32_0 : i32, i32
  }
  func.func @transform_3(%arg0: i32) -> (i32, i32) {
    %c0_i32 = arith.constant 0 : i32
    %c0_i32_0 = arith.constant 0 : i32
    return %arg0, %c0_i32 : i32, i32
  }
}

</mosaic_0001>

<llo_original>
// kernel: custom_model.1
$region0: #{custom_model.1}
  #allocation0 [shape = 'u32[]', space=smem, size = 0x4, offset = 0x4, fixed_abs, tag = 'smem constant byte address 0x4 - core index']
  #allocation1 [shape = 'u32[144,128]{1,0:T(1,128)}', space=vmem, size = 0x12000, scoped, tag = 'internal scratch']
  %s0 = inlined_call_operand.hbm [shape: f32[8,100], index: 0, kind: input, shape index: {}, may-alias: {0,3}]
  %s1 = inlined_call_operand.vmem [shape: f32[100,128], index: 1, kind: input, shape index: {}]
  %s2 = inlined_call_operand.vmem [shape: f32[128,100], index: 2, kind: input, shape index: {}]
  %s3 = inlined_call_operand.hbm [shape: f32[8,100], index: 3, kind: output, shape index: {}, may-alias: {0,3}]
  %s4 = sld [smem:[#allocation0]]
  $region26: #{custom_model.1} parent=0
    _
  %s6 = ssub.s32 1, %s4
  %s7 = scalar_select 0, %s6, %s4
  $region1: #{custom_model.1} parent=0
    #allocation2 [shape = 'u8[4096]{0}', space=vmem, size = 0x1000, scoped, tag = 'input window, operand 0, single buffered']
    #allocation3 [shape = 's32[1]{0}', space=sflag, size = 0x4, scoped, tag = 'scoped memory for custom_model.1']
    #allocation4 [shape = 's32[1]{0}', space=sflag, size = 0x4, scoped, tag = 'scoped memory for custom_model.1']
    #allocation5 [shape = 'u8[4096]{0}', space=vmem, size = 0x1000, scoped, tag = 'output window, operand 0, single buffered']
    %8 = vsyncpa [#allocation3], 0
    %9 = vsyncpa [#allocation4], 0
    // Predicated region
    $region2: #{custom_model.1} parent=1 // pred_check
      _
    $region3: #{custom_model.1} parent=1 // pred_check_branch
      %11 = sbr.rel (0) target = $region5
    $region4: #{custom_model.1} parent=1 // pred_region
      %s13 = ssub.s32 128, 128
      %14 = vsyncadd [#allocation3], %s13
      %s16 = sshll.u32 [#allocation2], 4
      %s17 = int_to_ptr.vmem [resolvable:$true] %s16
      %19 = dma.hbm_to_vmem [thread:$0]  %s0, 128, %s17, [#allocation3]
    $region5: #{custom_model.1} parent=1 // pred_fallthru
      _
    // Predicated region
    $region6: #{custom_model.1} parent=1 // pred_check
      _
    $region7: #{custom_model.1} parent=1 // pred_check_branch
      %21 = sbr.rel (0) target = $region9
    $region8: #{custom_model.1} parent=1 // pred_region
      _
    $region9: #{custom_model.1} parent=1 // pred_fallthru
      _
    // Predicated region
    $region10: #{custom_model.1} parent=1 // pred_check
      _
    $region11: #{custom_model.1} parent=1 // pred_check_branch
      %23 = sbr.rel (0) target = $region13
    $region12: #{custom_model.1} parent=1 // pred_region
      _
    $region13: #{custom_model.1} parent=1 // pred_fallthru
      _
    // Predicated region
    $region14: #{custom_model.1} parent=1 // pred_check
      _
    $region15: #{custom_model.1} parent=1 // pred_check_branch
      %25 = sbr.rel (0) target = $region17
    $region16: #{custom_model.1} parent=1 // pred_region
      %26 = dma.done [#allocation3], 128
    $region17: #{custom_model.1} parent=1 // pred_fallthru
      _
    %v27 = vld [vmem:[#allocation2] sm:$0xff]
    %v28 = vld [vmem:[%s1] sm:$0xff]
    %v29 = vld [vmem:[%s1 + $0x8] sm:$0xff]
    %v30 = vld [vmem:[%s1 + $0x10] sm:$0xff]
    %v31 = vld [vmem:[%s1 + $0x18] sm:$0xff]
    %v32 = vld [vmem:[%s1 + $0x20] sm:$0xff]
    %v33 = vld [vmem:[%s1 + $0x28] sm:$0xff]
    %v34 = vld [vmem:[%s1 + $0x30] sm:$0xff]
    %v35 = vld [vmem:[%s1 + $0x38] sm:$0xff]
    %v36 = vld [vmem:[%s1 + $0x40] sm:$0xff]
    %v37 = vld [vmem:[%s1 + $0x48] sm:$0xff]
    %v38 = vld [vmem:[%s1 + $0x50] sm:$0xff]
    %v39 = vld [vmem:[%s1 + $0x58] sm:$0xff]
    %v40 = vld [vmem:[%s1 + $0x60] sm:$0xf]
    %vm41 = vcmask 818176
    %v43 = vsel %vm41, %v27, 0
    %vm45 = vcmask 1043456
    %v47 = vsel %vm45, %v40, 0
    %49 = vmatprep.subr.mxu0 0.0
    %50 = vmatpush1.msra.mxu0 %v28
    %51 = vmatprep.subr.mxu0 0.0
    %52 = vmatpush1.msra.mxu0 %v29
    %53 = vmatprep.subr.mxu0 0.0
    %54 = vmatpush1.msra.mxu0 %v30
    %55 = vmatprep.subr.mxu0 0.0
    %56 = vmatpush1.msra.mxu0 %v31
    %57 = vmatprep.subr.mxu0 0.0
    %58 = vmatpush1.msra.mxu0 %v32
    %59 = vmatprep.subr.mxu0 0.0
    %60 = vmatpush1.msra.mxu0 %v33
    %61 = vmatprep.subr.mxu0 0.0
    %62 = vmatpush1.msra.mxu0 %v34
    %63 = vmatprep.subr.mxu0 0.0
    %64 = vmatpush1.msra.mxu0 %v35
    %65 = vmatprep.subr.mxu0 0.0
    %66 = vmatpush1.msra.mxu0 %v36
    %67 = vmatprep.subr.mxu0 0.0
    %68 = vmatpush1.msra.mxu0 %v37
    %69 = vmatprep.subr.mxu0 0.0
    %70 = vmatpush1.msra.mxu0 %v38
    %71 = vmatprep.subr.mxu0 0.0
    %72 = vmatpush1.msra.mxu0 %v39
    %73 = vmatprep.subr.mxu0 0.0
    %74 = vmatpush1.msra.mxu0 %v47
    %75 = vmatprep.subr.mxu0 0.0
    %76 = vmatpush1.msra.mxu0 0.0
    %77 = vmatprep.subr.mxu0 0.0
    %78 = vmatpush1.msra.mxu0 0.0
    %79 = vmatprep.subr.mxu0 0.0
    %80 = vmatpush1.msra.mxu0 0.0
    %81 = vmatprep.subr.mxu0 0.0
    %82 = vmatpush1.msra.mxu0 0.0
    %83 = vmatprep.subr.mxu0 0.0
    %84 = vmatpush1.msra.mxu0 0.0
    %85 = vmatprep.subr.mxu0 0.0
    %86 = vmatpush1.msra.mxu0 0.0
    %87 = vmatprep.subr.mxu0 0.0
    %88 = vmatpush1.msra.mxu0 0.0
    %89 = vmatprep.subr.mxu0 0.0
    %90 = vmatpush1.msra.mxu0 0.0
    %91 = vmatprep.subr.mxu0 0.0
    %92 = vmatpush1.msra.mxu0 0.0
    %93 = vmatprep.subr.mxu0 0.0
    %94 = vmatpush1.msra.mxu0 0.0
    %95 = vmatprep.subr.mxu0 0.0
    %96 = vmatpush1.msra.mxu0 0.0
    %97 = vmatprep.subr.mxu0 0.0
    %98 = vmatpush1.msra.mxu0 0.0
    %99 = vmatprep.subr.mxu0 0.0
    %100 = vmatpush1.msra.mxu0 0.0
    %101 = vmatprep.subr.mxu0 0.0
    %102 = vmatpush1.msra.mxu0 0.0
    %103 = vmatprep.subr.mxu0 0.0
    %104 = vmatpush1.msra.mxu0 0.0
    %105 = vmatprep.subr.mxu0 0.0
    %106 = vmatpush1.msra.mxu0 0.0
    %107 = vmatprep.subr.mxu0 0.0
    %108 = vmatpush1.msra.mxu0 0.0
    %109 = vmatprep.subr.mxu0 0.0
    %110 = vmatpush1.msra.mxu0 0.0
    %111 = vmatprep.subr.mxu0 0.0
    %112 = vmatpush1.msra.mxu0 0.0
    %113 = vmatprep.mubr.f32.mxu0 0.0
    %114 = vmatmul.mubr.f32.gmra.mrb[0].mxu0 %v43
    %v115 = vpop.f32.mrb[0].mxu0
    %v116 = vadd.f32 0.0, %v115
    %v117 = vpop.f32.mrb[0].mxu0
    %118 = vdwg.mxu0
    %v119 = vld [vmem:[%s2] sm:$0xff]
    %v120 = vld [vmem:[%s2 + $0x8] sm:$0xff]
    %v121 = vld [vmem:[%s2 + $0x10] sm:$0xff]
    %v122 = vld [vmem:[%s2 + $0x18] sm:$0xff]
    %v123 = vld [vmem:[%s2 + $0x20] sm:$0xff]
    %v124 = vld [vmem:[%s2 + $0x28] sm:$0xff]
    %v125 = vld [vmem:[%s2 + $0x30] sm:$0xff]
    %v126 = vld [vmem:[%s2 + $0x38] sm:$0xff]
    %v127 = vld [vmem:[%s2 + $0x40] sm:$0xff]
    %v128 = vld [vmem:[%s2 + $0x48] sm:$0xff]
    %v129 = vld [vmem:[%s2 + $0x50] sm:$0xff]
    %v130 = vld [vmem:[%s2 + $0x58] sm:$0xff]
    %v131 = vld [vmem:[%s2 + $0x60] sm:$0xff]
    %v132 = vld [vmem:[%s2 + $0x68] sm:$0xff]
    %v133 = vld [vmem:[%s2 + $0x70] sm:$0xff]
    %v134 = vld [vmem:[%s2 + $0x78] sm:$0xff]
    %135 = vmatprep.subr.mxu0 0.0
    %136 = vmatpush1.msra.mxu0 %v119
    %137 = vmatprep.subr.mxu0 0.0
    %138 = vmatpush1.msra.mxu0 %v120
    %139 = vmatprep.subr.mxu0 0.0
    %140 = vmatpush1.msra.mxu0 %v121
    %141 = vmatprep.subr.mxu0 0.0
    %142 = vmatpush1.msra.mxu0 %v122
    %143 = vmatprep.subr.mxu0 0.0
    %144 = vmatpush1.msra.mxu0 %v123
    %145 = vmatprep.subr.mxu0 0.0
    %146 = vmatpush1.msra.mxu0 %v124
    %147 = vmatprep.subr.mxu0 0.0
    %148 = vmatpush1.msra.mxu0 %v125
    %149 = vmatprep.subr.mxu0 0.0
    %150 = vmatpush1.msra.mxu0 %v126
    %151 = vmatprep.subr.mxu0 0.0
    %152 = vmatpush1.msra.mxu0 %v127
    %153 = vmatprep.subr.mxu0 0.0
    %154 = vmatpush1.msra.mxu0 %v128
    %155 = vmatprep.subr.mxu0 0.0
    %156 = vmatpush1.msra.mxu0 %v129
    %157 = vmatprep.subr.mxu0 0.0
    %158 = vmatpush1.msra.mxu0 %v130
    %159 = vmatprep.subr.mxu0 0.0
    %160 = vmatpush1.msra.mxu0 %v131
    %161 = vmatprep.subr.mxu0 0.0
    %162 = vmatpush1.msra.mxu0 %v132
    %163 = vmatprep.subr.mxu0 0.0
    %164 = vmatpush1.msra.mxu0 %v133
    %165 = vmatprep.subr.mxu0 0.0
    %166 = vmatpush1.msra.mxu0 %v134
    %167 = vmatprep.subr.mxu0 0.0
    %168 = vmatpush1.msra.mxu0 0.0
    %169 = vmatprep.subr.mxu0 0.0
    %170 = vmatpush1.msra.mxu0 0.0
    %171 = vmatprep.subr.mxu0 0.0
    %172 = vmatpush1.msra.mxu0 0.0
    %173 = vmatprep.subr.mxu0 0.0
    %174 = vmatpush1.msra.mxu0 0.0
    %175 = vmatprep.subr.mxu0 0.0
    %176 = vmatpush1.msra.mxu0 0.0
    %177 = vmatprep.subr.mxu0 0.0
    %178 = vmatpush1.msra.mxu0 0.0
    %179 = vmatprep.subr.mxu0 0.0
    %180 = vmatpush1.msra.mxu0 0.0
    %181 = vmatprep.subr.mxu0 0.0
    %182 = vmatpush1.msra.mxu0 0.0
    %183 = vmatprep.subr.mxu0 0.0
    %184 = vmatpush1.msra.mxu0 0.0
    %185 = vmatprep.subr.mxu0 0.0
    %186 = vmatpush1.msra.mxu0 0.0
    %187 = vmatprep.subr.mxu0 0.0
    %188 = vmatpush1.msra.mxu0 0.0
    %189 = vmatprep.subr.mxu0 0.0
    %190 = vmatpush1.msra.mxu0 0.0
    %191 = vmatprep.subr.mxu0 0.0
    %192 = vmatpush1.msra.mxu0 0.0
    %193 = vmatprep.subr.mxu0 0.0
    %194 = vmatpush1.msra.mxu0 0.0
    %195 = vmatprep.subr.mxu0 0.0
    %196 = vmatpush1.msra.mxu0 0.0
    %197 = vmatprep.subr.mxu0 0.0
    %198 = vmatpush1.msra.mxu0 0.0
    %199 = vmatprep.mubr.f32.mxu0 0.0
    %200 = vmatmul.mubr.f32.gmra.mrb[0].mxu0 %v116
    %v201 = vpop.f32.mrb[0].mxu0
    %v202 = vadd.f32 %v27, %v201
    %v203 = vpop.f32.mrb[0].mxu0
    %204 = vdwg.mxu0
    %205 = vst.msk [vmem:[#allocation5] sm:$0xff] %vm41, %v202
    // Predicated region
    $region18: #{custom_model.1} parent=1 // pred_check
      _
    $region19: #{custom_model.1} parent=1 // pred_check_branch
      %207 = sbr.rel (0) target = $region21
    $region20: #{custom_model.1} parent=1 // pred_region
      %s209 = ssub.s32 128, 128
      %210 = vsyncadd [#allocation4], %s209
      %s212 = sshll.u32 [#allocation5], 4
      %s213 = int_to_ptr.vmem [resolvable:$true] %s212
      %215 = dma.vmem_to_hbm [thread:$0]  %s213, 128, %s3, [#allocation4]
    $region21: #{custom_model.1} parent=1 // pred_fallthru
      _
    // Predicated region
    $region22: #{custom_model.1} parent=1 // pred_check
      _
    $region23: #{custom_model.1} parent=1 // pred_check_branch
      %217 = sbr.rel (0) target = $region25
    $region24: #{custom_model.1} parent=1 // pred_region
      %218 = dma.done [#allocation4], 128
    $region25: #{custom_model.1} parent=1 // pred_fallthru
      _
    %219 = vsyncpa [#allocation3], 1
    %220 = vsyncpa [#allocation4], 1

</llo_original>
